<compile_context>
chip_gen: v6e
topology: v6e:2x2x1
jax: 0.10.0
libtpu: 0.0.40
codegen_flags: <defaults>
</compile_context>

<pallas_src>
import functools

import jax
import jax.numpy as jnp
from jax.experimental import pallas as pl
from jax.experimental.pallas import tpu as pltpu

BN_EPS = 1e-5
LANE = 128


def _round_up(n, m):
    return ((n + m - 1) // m) * m


# -----------------------------------------------------------------------------
# Kernel
# -----------------------------------------------------------------------------
def _mlp_kernel(x_ref, w1_ref, w2_ref, w3_ref, w4_ref, b_ref, o_ref, *, out_dims):
    """Fused 4-layer MLP on one batch tile.

    x_ref : (TILE_B, feat)        bf16   (feature dim = true size, no 128-pad)
    wK_ref: (D{K-1}p, DKp) bf16          (BN already folded in; W1 is (feat, D1p))
    b_ref : (4, max_pad)   f32           packed folded biases, one row per layer
    o_ref : (TILE_B, Cp)   bf16/f32      logits (lane-padded; sliced in wrapper)
    """
    h = x_ref[...]
    w_refs = (w1_ref, w2_ref, w3_ref, w4_ref)
    for li in range(4):
        d_out = out_dims[li]
        z = jnp.dot(h, w_refs[li][...], preferred_element_type=jnp.float32)
        z = z + b_ref[li:li + 1, :d_out]                      # f32 epilogue
        if li < 3:
            # ReLU; Dropout = identity in eval mode.
            h = jnp.maximum(z, 0.0).astype(jnp.bfloat16)
        else:
            o_ref[...] = z.astype(o_ref.dtype)


# -----------------------------------------------------------------------------
# Parameter preparation: fold BN into Linear, pad OUT dims to 128 lanes, bf16
# -----------------------------------------------------------------------------
def prepare_inference_params(params, input_size):
    p = list(params)
    Ws, bs = [], []
    for _ in range(3):
        w, b = p.pop(0), p.pop(0)
        g, be, m, v = p.pop(0), p.pop(0), p.pop(0), p.pop(0)
        s = g * jax.lax.rsqrt(v + BN_EPS)          # (1, out)
        Ws.append(w * s)                            # scale output columns
        bs.append((b - m) * s + be)                 # folded bias
    w, b = p.pop(0), p.pop(0)
    Ws.append(w)
    bs.append(b)

    dims = [input_size] + [w.shape[1] for w in Ws]
    # Input feature dim stays unpadded (fed directly); only layer outputs pad to 128.
    dims_pad = [dims[0]] + [_round_up(d, LANE) for d in dims[1:]]

    weights_pad = []
    for li, w in enumerate(Ws):
        wp = jnp.zeros((dims_pad[li], dims_pad[li + 1]), jnp.float32)
        wp = wp.at[:w.shape[0], :w.shape[1]].set(w)
        weights_pad.append(wp.astype(jnp.bfloat16))

    max_pad = max(dims_pad[1:])
    bias_pack = jnp.zeros((4, max_pad), jnp.float32)
    for li, b in enumerate(bs):
        bias_pack = bias_pack.at[li, :b.shape[1]].set(b[0])

    return tuple(weights_pad), bias_pack, tuple(dims_pad)


# -----------------------------------------------------------------------------
# Batch-tile selection
# -----------------------------------------------------------------------------
def _choose_tile_b(batch, feat, dims_pad, max_tile=4096,
                   vmem_budget=24 * 1024 * 1024):
    """Large tiles amortize per-step overhead; cap by a VMEM budget; >=4 grid
    steps for big batches so v7x's second TensorCore has work; 16-row multiples
    for bf16 sublane packing."""
    max_pad = max(dims_pad[1:])
    # Rough per-row VMEM bytes: double-buffered bf16 x + double-buffered output
    # + a few live f32/bf16 intermediates of width max_pad.
    per_row = 4 * feat + 4 * dims_pad[-1] + 16 * max_pad
    fit = max(256, (vmem_budget // per_row) // 16 * 16)
    cap = min(max_tile, fit)
    steps = max(1, pl.cdiv(batch, cap))
    if batch >= 4096:
        steps = max(steps, 4)                      # shard across v7x's 2 TCs
    tile = _round_up(pl.cdiv(batch, steps), 16)
    return max(16, min(tile, cap))


# -----------------------------------------------------------------------------
# Wrapper
# -----------------------------------------------------------------------------
def auto_neural_network_forward(x, weights, bias_pack, dims_pad, num_classes,
                                *, tile_b=None, out_dtype=jnp.bfloat16):
    batch, feat = x.shape
    cp = dims_pad[-1]

    if tile_b is None:
        tile_b = _choose_tile_b(batch, feat, dims_pad)
    tile_b = _round_up(min(tile_b, _round_up(batch, 16)), 16)
    grid_b = pl.cdiv(batch, tile_b)
    batch_pad = grid_b * tile_b

    # Cheap bf16 cast of the ORIGINAL (batch, feat) array -- no 128-feature pad,
    # no extra 8x-inflated HBM pass.  Batch rows padded only up to the tile.
    xb = x.astype(jnp.bfloat16)
    if batch_pad != batch:
        xb = jnp.pad(xb, ((0, batch_pad - batch), (0, 0)))

    out_dims = tuple(dims_pad[1:])
    kernel = functools.partial(_mlp_kernel, out_dims=out_dims)

    flops = 2 * batch_pad * sum(dims_pad[i] * dims_pad[i + 1] for i in range(4))
    bytes_accessed = (xb.size * 2
                      + sum(w.size for w in weights) * 2
                      + bias_pack.size * 4
                      + batch_pad * cp * jnp.dtype(out_dtype).itemsize)

    out = pl.pallas_call(
        kernel,
        out_shape=jax.ShapeDtypeStruct((batch_pad, cp), out_dtype),
        grid=(grid_b,),
        in_specs=[
            pl.BlockSpec((tile_b, feat), lambda i: (i, 0)),       # x: pipelined
            pl.BlockSpec(weights[0].shape, lambda i: (0, 0)),     # weights stay
            pl.BlockSpec(weights[1].shape, lambda i: (0, 0)),     # VMEM-resident
            pl.BlockSpec(weights[2].shape, lambda i: (0, 0)),
            pl.BlockSpec(weights[3].shape, lambda i: (0, 0)),
            pl.BlockSpec(bias_pack.shape, lambda i: (0, 0)),      # packed biases
        ],
        out_specs=pl.BlockSpec((tile_b, cp), lambda i: (i, 0)),
        compiler_params=pltpu.CompilerParams(
            dimension_semantics=("parallel",),                    # v7x 2 TCs
            vmem_limit_bytes=32 * 1024 * 1024),
        cost_estimate=pl.CostEstimate(flops=flops, transcendentals=0,
                                      bytes_accessed=bytes_accessed),
    )(xb, *weights, bias_pack)

    return out[:batch, :num_classes]


# -----------------------------------------------------------------------------
# Deterministic parameter init matching AutoNeuralNetwork.__init__
# -----------------------------------------------------------------------------
def make_params(key, input_size, num_classes):
    hidden1 = max(64, input_size * 2)
    hidden2 = max(32, input_size)
    hidden3 = max(16, input_size // 2)
    dims = [input_size, hidden1, hidden2, hidden3, num_classes]

    params = []
    keys = jax.random.split(key, 8)
    for li in range(4):
        fan_in, fan_out = dims[li], dims[li + 1]
        limit = (6.0 / (fan_in + fan_out)) ** 0.5          # xavier_uniform_
        w = jax.random.uniform(keys[2 * li], (fan_in, fan_out),
                               minval=-limit, maxval=limit, dtype=jnp.float32)
        b = jnp.zeros((1, fan_out), dtype=jnp.float32)
        params.extend([w, b])
        if li < 3:
            h = fan_out
            gamma = 1.0 + 0.01 * jnp.arange(h, dtype=jnp.float32).reshape(1, h)
            beta = 0.02 * jnp.arange(h, dtype=jnp.float32).reshape(1, h)
            rmean = 0.05 * jnp.sin(jnp.arange(h, dtype=jnp.float32)).reshape(1, h)
            rvar = 1.0 + 0.1 * jnp.cos(jnp.arange(h, dtype=jnp.float32)).reshape(1, h) ** 2
            params.extend([gamma, beta, rmean, rvar])
    return tuple(params)


# -----------------------------------------------------------------------------
# References
# -----------------------------------------------------------------------------
def reference_forward_f32(x, params):
    """Plain-JAX f32 eval-mode forward (unfolded BN)."""
    p = list(params)
    h = x
    for _ in range(3):
        w, b = p.pop(0), p.pop(0)
        g, be, m, v = p.pop(0), p.pop(0), p.pop(0), p.pop(0)
        z = h @ w + b
        z = (z - m) * jax.lax.rsqrt(v + BN_EPS) * g + be
        h = jnp.maximum(z, 0.0)
    w, b = p.pop(0), p.pop(0)
    return h @ w + b


def reference_forward_matched(x, weights, bias_pack, dims_pad, num_classes,
                              out_dtype=jnp.bfloat16):
    """Plain-JAX reference matching the kernel's folded/padded bf16 math."""
    h = x.astype(jnp.bfloat16)
    for li in range(4):
        z = jnp.dot(h, weights[li], preferred_element_type=jnp.float32)
        z = z + bias_pack[li:li + 1, :dims_pad[li + 1]]
        if li < 3:
            h = jnp.maximum(z, 0.0).astype(jnp.bfloat16)
        else:
            out = z.astype(out_dtype)
    return out[:, :num_classes]


if __name__ == "__main__":
    batch = 8
    input_size = 16
    num_classes = 4

    key = jax.random.PRNGKey(0)
    kx, kp = jax.random.split(key)
    x = jax.random.normal(kx, (batch, input_size), dtype=jnp.float32)
    params = make_params(kp, input_size, num_classes)

    weights, bias_pack, dims_pad = prepare_inference_params(params, input_size)

    out = auto_neural_network_forward(x, weights, bias_pack, dims_pad, num_classes)
    out = jax.block_until_ready(out)
    assert out.shape == (batch, num_classes)
    out_f32 = out.astype(jnp.float32)

    # Tight check vs a plain-JAX reference using the same folded/padded bf16 math.
    ref_matched = reference_forward_matched(
        x, weights, bias_pack, dims_pad, num_classes).astype(jnp.float32)
    assert jnp.allclose(out_f32, ref_matched, atol=5e-2, rtol=5e-2), \
        "mismatch vs matched bf16 reference"

    # Looser check vs the full-f32 unfolded eval-mode reference (bf16 error).
    ref_f32 = reference_forward_f32(x, params)
    assert jnp.allclose(out_f32, ref_f32, atol=1.5e-1, rtol=1.5e-1), \
        "mismatch vs f32 reference"

    print("KERNEL_OK")
</pallas_src>

<mosaic_0001>
module attributes {stable_mosaic.version = 11 : i64} {
  func.func @_mlp_kernel(%arg0: i32, %arg1: memref<16x16xbf16, #tpu.memory_space<vmem>>, %arg2: memref<16x128xbf16, #tpu.memory_space<vmem>>, %arg3: memref<128x128xbf16, #tpu.memory_space<vmem>>, %arg4: memref<128x128xbf16, #tpu.memory_space<vmem>>, %arg5: memref<128x128xbf16, #tpu.memory_space<vmem>>, %arg6: memref<4x128xf32, #tpu.memory_space<vmem>>, %arg7: memref<16x128xbf16, #tpu.memory_space<vmem>>) attributes {dimension_semantics = [#tpu.dimension_semantics<parallel>], iteration_bounds = array<i64: 1>, scalar_prefetch = 0 : i64, scratch_operands = 0 : i64, tpu.core_type = #tpu.core_type<tc>, window_params = [{transform_indices = @transform_0, window_bounds = array<i64: 16, 16>}, {pipeline_mode = #tpu.pipeline_mode<synchronous>, transform_indices = @transform_1, window_bounds = array<i64: 16, 128>}, {pipeline_mode = #tpu.pipeline_mode<synchronous>, transform_indices = @transform_2, window_bounds = array<i64: 128, 128>}, {pipeline_mode = #tpu.pipeline_mode<synchronous>, transform_indices = @transform_3, window_bounds = array<i64: 128, 128>}, {pipeline_mode = #tpu.pipeline_mode<synchronous>, transform_indices = @transform_4, window_bounds = array<i64: 128, 128>}, {pipeline_mode = #tpu.pipeline_mode<synchronous>, transform_indices = @transform_5, window_bounds = array<i64: 4, 128>}, {transform_indices = @transform_6, window_bounds = array<i64: 16, 128>}]} {
    %c0 = arith.constant 0 : index
    %c0_0 = arith.constant 0 : index
    %0 = vector.load %arg1[%c0, %c0_0] : memref<16x16xbf16, #tpu.memory_space<vmem>>, vector<16x16xbf16>
    %c0_1 = arith.constant 0 : index
    %c0_2 = arith.constant 0 : index
    %1 = vector.load %arg2[%c0_1, %c0_2] : memref<16x128xbf16, #tpu.memory_space<vmem>>, vector<16x128xbf16>
    %cst = arith.constant dense<0.000000e+00> : vector<16x128xf32>
    %2 = tpu.matmul %0, %1, %cst {dimension_numbers = #tpu.dot_dimension_numbers<[1], [0], [0], [1], [0, 0, 1, 1], [], []>} : vector<16x16xbf16>, vector<16x128xbf16>, vector<16x128xf32> -> vector<16x128xf32>
    %c0_3 = arith.constant 0 : index
    %c0_4 = arith.constant 0 : index
    %3 = vector.load %arg6[%c0_3, %c0_4] : memref<4x128xf32, #tpu.memory_space<vmem>>, vector<1x128xf32>
    %4 = vector.broadcast %3 : vector<1x128xf32> to vector<16x128xf32>
    %5 = arith.addf %2, %4 : vector<16x128xf32>
    %cst_5 = arith.constant 0.000000e+00 : f32
    %6 = vector.broadcast %cst_5 : f32 to vector<16x128xf32>
    %7 = arith.maximumf %5, %6 : vector<16x128xf32>
    %8 = arith.truncf %7 : vector<16x128xf32> to vector<16x128xbf16>
    %c0_6 = arith.constant 0 : index
    %c0_7 = arith.constant 0 : index
    %9 = vector.load %arg3[%c0_6, %c0_7] : memref<128x128xbf16, #tpu.memory_space<vmem>>, vector<128x128xbf16>
    %cst_8 = arith.constant dense<0.000000e+00> : vector<16x128xf32>
    %10 = tpu.matmul %8, %9, %cst_8 {dimension_numbers = #tpu.dot_dimension_numbers<[1], [0], [0], [1], [0, 0, 1, 1], [], []>} : vector<16x128xbf16>, vector<128x128xbf16>, vector<16x128xf32> -> vector<16x128xf32>
    %c1 = arith.constant 1 : index
    %c0_9 = arith.constant 0 : index
    %11 = vector.load %arg6[%c1, %c0_9] : memref<4x128xf32, #tpu.memory_space<vmem>>, vector<1x128xf32>
    %12 = vector.broadcast %11 : vector<1x128xf32> to vector<16x128xf32>
    %13 = arith.addf %10, %12 : vector<16x128xf32>
    %cst_10 = arith.constant 0.000000e+00 : f32
    %14 = vector.broadcast %cst_10 : f32 to vector<16x128xf32>
    %15 = arith.maximumf %13, %14 : vector<16x128xf32>
    %16 = arith.truncf %15 : vector<16x128xf32> to vector<16x128xbf16>
    %c0_11 = arith.constant 0 : index
    %c0_12 = arith.constant 0 : index
    %17 = vector.load %arg4[%c0_11, %c0_12] : memref<128x128xbf16, #tpu.memory_space<vmem>>, vector<128x128xbf16>
    %cst_13 = arith.constant dense<0.000000e+00> : vector<16x128xf32>
    %18 = tpu.matmul %16, %17, %cst_13 {dimension_numbers = #tpu.dot_dimension_numbers<[1], [0], [0], [1], [0, 0, 1, 1], [], []>} : vector<16x128xbf16>, vector<128x128xbf16>, vector<16x128xf32> -> vector<16x128xf32>
    %c2 = arith.constant 2 : index
    %c0_14 = arith.constant 0 : index
    %19 = vector.load %arg6[%c2, %c0_14] : memref<4x128xf32, #tpu.memory_space<vmem>>, vector<1x128xf32>
    %20 = vector.broadcast %19 : vector<1x128xf32> to vector<16x128xf32>
    %21 = arith.addf %18, %20 : vector<16x128xf32>
    %cst_15 = arith.constant 0.000000e+00 : f32
    %22 = vector.broadcast %cst_15 : f32 to vector<16x128xf32>
    %23 = arith.maximumf %21, %22 : vector<16x128xf32>
    %24 = arith.truncf %23 : vector<16x128xf32> to vector<16x128xbf16>
    %c0_16 = arith.constant 0 : index
    %c0_17 = arith.constant 0 : index
    %25 = vector.load %arg5[%c0_16, %c0_17] : memref<128x128xbf16, #tpu.memory_space<vmem>>, vector<128x128xbf16>
    %cst_18 = arith.constant dense<0.000000e+00> : vector<16x128xf32>
    %26 = tpu.matmul %24, %25, %cst_18 {dimension_numbers = #tpu.dot_dimension_numbers<[1], [0], [0], [1], [0, 0, 1, 1], [], []>} : vector<16x128xbf16>, vector<128x128xbf16>, vector<16x128xf32> -> vector<16x128xf32>
    %c3 = arith.constant 3 : index
    %c0_19 = arith.constant 0 : index
    %27 = vector.load %arg6[%c3, %c0_19] : memref<4x128xf32, #tpu.memory_space<vmem>>, vector<1x128xf32>
    %28 = vector.broadcast %27 : vector<1x128xf32> to vector<16x128xf32>
    %29 = arith.addf %26, %28 : vector<16x128xf32>
    %30 = arith.truncf %29 : vector<16x128xf32> to vector<16x128xbf16>
    %c0_20 = arith.constant 0 : index
    %c0_21 = arith.constant 0 : index
    %31 = vector.load %arg7[%c0_20, %c0_21] : memref<16x128xbf16, #tpu.memory_space<vmem>>, vector<16x128xbf16>
    tpu.vector_store %arg7[%c0_20, %c0_21], %30 {strides = array<i32>} : memref<16x128xbf16, #tpu.memory_space<vmem>>, vector<16x128xbf16>,
    return
  }
  func.func @transform_0(%arg0: i32) -> (i32, i32) {
    %c0_i32 = arith.constant 0 : i32
    %c0_i32_0 = arith.constant 0 : i32
    return %arg0, %c0_i32 : i32, i32
  }
  func.func @transform_1(%arg0: i32) -> (i32, i32) {
    %c0_i32 = arith.constant 0 : i32
    %c0_i32_0 = arith.constant 0 : i32
    %c0_i32_1 = arith.constant 0 : i32
    return %c0_i32, %c0_i32_0 : i32, i32
  }
  func.func @transform_2(%arg0: i32) -> (i32, i32) {
    %c0_i32 = arith.constant 0 : i32
    %c0_i32_0 = arith.constant 0 : i32
    %c0_i32_1 = arith.constant 0 : i32
    return %c0_i32, %c0_i32_0 : i32, i32
  }
  func.func @transform_3(%arg0: i32) -> (i32, i32) {
    %c0_i32 = arith.constant 0 : i32
    %c0_i32_0 = arith.constant 0 : i32
    %c0_i32_1 = arith.constant 0 : i32
    return %c0_i32, %c0_i32_0 : i32, i32
  }
  func.func @transform_4(%arg0: i32) -> (i32, i32) {
    %c0_i32 = arith.constant 0 : i32
    %c0_i32_0 = arith.constant 0 : i32
    %c0_i32_1 = arith.constant 0 : i32
    return %c0_i32, %c0_i32_0 : i32, i32
  }
  func.func @transform_5(%arg0: i32) -> (i32, i32) {
    %c0_i32 = arith.constant 0 : i32
    %c0_i32_0 = arith.constant 0 : i32
    %c0_i32_1 = arith.constant 0 : i32
    return %c0_i32, %c0_i32_0 : i32, i32
  }
  func.func @transform_6(%arg0: i32) -> (i32, i32) {
    %c0_i32 = arith.constant 0 : i32
    %c0_i32_0 = arith.constant 0 : i32
    return %arg0, %c0_i32 : i32, i32
  }
}

</mosaic_0001>

<llo_original>
// kernel: tpu_custom_call.1
$region0: #{tpu_custom_call.1}
  #allocation0 [shape = 'u32[]', space=smem, size = 0x4, offset = 0x4, fixed_abs, tag = 'smem constant byte address 0x4 - core index']
  #allocation1 [shape = 'u32[144,128]{1,0:T(1,128)}', space=vmem, size = 0x12000, scoped, tag = 'internal scratch']
  %s0 = inlined_call_operand.hbm [shape: bf16[16,16], index: 0, kind: input, shape index: {}]
  %s1 = inlined_call_operand.hbm [shape: bf16[16,128], index: 1, kind: input, shape index: {}]
  %s2 = inlined_call_operand.hbm [shape: bf16[128,128], index: 2, kind: input, shape index: {}]
  %s3 = inlined_call_operand.hbm [shape: bf16[128,128], index: 3, kind: input, shape index: {}]
  %s4 = inlined_call_operand.hbm [shape: bf16[128,128], index: 4, kind: input, shape index: {}]
  %s5 = inlined_call_operand.vmem [shape: f32[4,128], index: 5, kind: input, shape index: {}]
  %s6 = inlined_call_operand.hbm [shape: bf16[16,128], index: 6, kind: output, shape index: {}]
  %s7 = sld [smem:[#allocation0]]
  $region54: #{tpu_custom_call.1} parent=0
    _
  %s9 = ssub.s32 1, %s7
  %s10 = scalar_select 0, %s9, %s7
  $region1: #{tpu_custom_call.1} parent=0
    #allocation2 [shape = 'u8[4096]{0}', space=vmem, size = 0x1000, scoped, tag = 'input window, operand 0, single buffered']
    #allocation3 [shape = 's32[1]{0}', space=sflag, size = 0x4, scoped, tag = 'scoped memory for tpu_custom_call.1']
    #allocation4 [shape = 's32[1]{0}', space=sflag, size = 0x4, scoped, tag = 'scoped memory for tpu_custom_call.1']
    #allocation5 [shape = 'u8[4096]{0}', space=vmem, size = 0x1000, scoped, tag = 'input window, operand 1, single buffered']
    #allocation6 [shape = 's32[1]{0}', space=sflag, size = 0x4, scoped, tag = 'scoped memory for tpu_custom_call.1']
    #allocation7 [shape = 'u8[32768]{0}', space=vmem, size = 0x8000, scoped, tag = 'input window, operand 2, single buffered']
    #allocation8 [shape = 'u8[32768]{0}', space=vmem, size = 0x8000, scoped, tag = 'input window, operand 3, single buffered']
    #allocation9 [shape = 's32[1]{0}', space=sflag, size = 0x4, scoped, tag = 'scoped memory for tpu_custom_call.1']
    #allocation10 [shape = 'u8[32768]{0}', space=vmem, size = 0x8000, scoped, tag = 'input window, operand 4, single buffered']
    #allocation11 [shape = 'u8[4096]{0}', space=vmem, size = 0x1000, scoped, tag = 'output window, operand 0, single buffered']
    %11 = vsyncpa [#allocation3], 0
    %12 = vsyncpa [#allocation6], 0
    %13 = vsyncpa [#allocation9], 0
    %14 = vsyncpa [#allocation4], 0
    // Predicated region
    $region2: #{tpu_custom_call.1} parent=1 // pred_check
      _
    $region3: #{tpu_custom_call.1} parent=1 // pred_check_branch
      %16 = sbr.rel (0) target = $region5
    $region4: #{tpu_custom_call.1} parent=1 // pred_region
      %s18 = ssub.s32 128, 128
      %19 = vsyncadd [#allocation3], %s18
      %s20 = sshll.u32 [#allocation2], 4
      %s21 = int_to_ptr.vmem [resolvable:$true] %s20
      %26 = dma.hbm_to_vmem [thread:$0]  %s0, 128, %s21, [#allocation3], 64, 64, 4
    $region5: #{tpu_custom_call.1} parent=1 // pred_fallthru
      _
    // Predicated region
    $region6: #{tpu_custom_call.1} parent=1 // pred_check
      _
    $region7: #{tpu_custom_call.1} parent=1 // pred_check_branch
      %28 = sbr.rel (0) target = $region9
    $region8: #{tpu_custom_call.1} parent=1 // pred_region
      %s30 = ssub.s32 128, 128
      %31 = vsyncadd [#allocation6], %s30
      %s32 = sshll.u32 [#allocation5], 4
      %s33 = int_to_ptr.vmem [resolvable:$true] %s32
      %38 = dma.hbm_to_vmem [thread:$0]  %s1, 128, %s33, [#allocation6], 64, 64, 4
    $region9: #{tpu_custom_call.1} parent=1 // pred_fallthru
      _
    // Predicated region
    $region10: #{tpu_custom_call.1} parent=1 // pred_check
      _
    $region11: #{tpu_custom_call.1} parent=1 // pred_check_branch
      %40 = sbr.rel (0) target = $region13
    $region12: #{tpu_custom_call.1} parent=1 // pred_region
      %s42 = ssub.s32 1024, 1024
      %43 = vsyncadd [#allocation6], %s42
      %s44 = sshll.u32 [#allocation7], 4
      %s45 = int_to_ptr.vmem [resolvable:$true] %s44
      %50 = dma.hbm_to_vmem [thread:$0]  %s2, 1024, %s45, [#allocation6], 64, 64, 4
    $region13: #{tpu_custom_call.1} parent=1 // pred_fallthru
      _
    // Predicated region
    $region14: #{tpu_custom_call.1} parent=1 // pred_check
      _
    $region15: #{tpu_custom_call.1} parent=1 // pred_check_branch
      %52 = sbr.rel (0) target = $region17
    $region16: #{tpu_custom_call.1} parent=1 // pred_region
      %s54 = ssub.s32 1024, 1024
      %55 = vsyncadd [#allocation9], %s54
      %s56 = sshll.u32 [#allocation8], 4
      %s57 = int_to_ptr.vmem [resolvable:$true] %s56
      %62 = dma.hbm_to_vmem [thread:$0]  %s3, 1024, %s57, [#allocation9], 64, 64, 4
    $region17: #{tpu_custom_call.1} parent=1 // pred_fallthru
      _
    // Predicated region
    $region18: #{tpu_custom_call.1} parent=1 // pred_check
      _
    $region19: #{tpu_custom_call.1} parent=1 // pred_check_branch
      %64 = sbr.rel (0) target = $region21
    $region20: #{tpu_custom_call.1} parent=1 // pred_region
      %s66 = ssub.s32 1024, 1024
      %67 = vsyncadd [#allocation9], %s66
      %s68 = sshll.u32 [#allocation10], 4
      %s69 = int_to_ptr.vmem [resolvable:$true] %s68
      %74 = dma.hbm_to_vmem [thread:$0]  %s4, 1024, %s69, [#allocation9], 64, 64, 4
    $region21: #{tpu_custom_call.1} parent=1 // pred_fallthru
      _
    // Predicated region
    $region22: #{tpu_custom_call.1} parent=1 // pred_check
      _
    $region23: #{tpu_custom_call.1} parent=1 // pred_check_branch
      %76 = sbr.rel (0) target = $region25
    $region24: #{tpu_custom_call.1} parent=1 // pred_region
      _
    $region25: #{tpu_custom_call.1} parent=1 // pred_fallthru
      _
    // Predicated region
    $region26: #{tpu_custom_call.1} parent=1 // pred_check
      _
    $region27: #{tpu_custom_call.1} parent=1 // pred_check_branch
      %78 = sbr.rel (0) target = $region29
    $region28: #{tpu_custom_call.1} parent=1 // pred_region
      %79 = dma.done [#allocation3], 128
    $region29: #{tpu_custom_call.1} parent=1 // pred_fallthru
      _
    // Predicated region
    $region30: #{tpu_custom_call.1} parent=1 // pred_check
      _
    $region31: #{tpu_custom_call.1} parent=1 // pred_check_branch
      %81 = sbr.rel (0) target = $region33
    $region32: #{tpu_custom_call.1} parent=1 // pred_region
      %82 = dma.done [#allocation6], 128
    $region33: #{tpu_custom_call.1} parent=1 // pred_fallthru
      _
    // Predicated region
    $region34: #{tpu_custom_call.1} parent=1 // pred_check
      _
    $region35: #{tpu_custom_call.1} parent=1 // pred_check_branch
      %84 = sbr.rel (0) target = $region37
    $region36: #{tpu_custom_call.1} parent=1 // pred_region
      %85 = dma.done [#allocation6], 1024
    $region37: #{tpu_custom_call.1} parent=1 // pred_fallthru
      _
    // Predicated region
    $region38: #{tpu_custom_call.1} parent=1 // pred_check
      _
    $region39: #{tpu_custom_call.1} parent=1 // pred_check_branch
      %87 = sbr.rel (0) target = $region41
    $region40: #{tpu_custom_call.1} parent=1 // pred_region
      %88 = dma.done [#allocation9], 1024
    $region41: #{tpu_custom_call.1} parent=1 // pred_fallthru
      _
    // Predicated region
    $region42: #{tpu_custom_call.1} parent=1 // pred_check
      _
    $region43: #{tpu_custom_call.1} parent=1 // pred_check_branch
      %90 = sbr.rel (0) target = $region45
    $region44: #{tpu_custom_call.1} parent=1 // pred_region
      %91 = dma.done [#allocation9], 1024
    $region45: #{tpu_custom_call.1} parent=1 // pred_fallthru
      _
    %v93 = vld [vmem:[#allocation2] sm:$0xf]
    %v94 = vld [vmem:[#allocation2 + $0x4] sm:$0xf]
    %v95 = vld [vmem:[#allocation5] sm:$0xf]
    %v96 = vld [vmem:[#allocation5 + $0x4] sm:$0xf]
    %v97 = vld [vmem:[%s5] sm:$0x1]
    %v98 = vlaneseq
    %v99 = vshrl.u32 %v98, 7
    %v100 = vsub.s32 0, %v99
    %v101 = vrot.slane %v97, %v100
    %v104 = vunpack.c.l.b16 %v93
    %v105 = vunpack.c.l.b16 %v94
    %v106 = vpack.c.b16 %v105, %v104
    %v109 = vunpack.c.l.b16 %v95
    %v110 = vunpack.c.l.b16 %v96
    %v111 = vpack.c.b16 %v110, %v109
    %vm113 = vcmask 130048
    %v115 = vsel %vm113, %v106, 0
    %117 = vmatprep.subr.bf16.mxu0 0
    %118 = vmatpush1.bf16.msra.mxu0 0
    %119 = vmatprep.subr.bf16.mxu0 0
    %120 = vmatpush1.bf16.msra.mxu0 0
    %121 = vmatprep.subr.bf16.mxu0 0
    %122 = vmatpush1.bf16.msra.mxu0 0
    %123 = vmatprep.subr.bf16.mxu0 0
    %124 = vmatpush1.bf16.msra.mxu0 0
    %125 = vmatprep.subr.bf16.mxu0 0
    %126 = vmatpush1.bf16.msra.mxu0 0
    %127 = vmatprep.subr.bf16.mxu0 0
    %128 = vmatpush1.bf16.msra.mxu0 0
    %129 = vmatprep.subr.bf16.mxu0 0
    %130 = vmatpush1.bf16.msra.mxu0 0
    %131 = vmatprep.subr.bf16.mxu0 0
    %132 = vmatpush1.bf16.msra.mxu0 %v111
    %133 = vmatprep.subr.bf16.mxu0 0
    %134 = vmatpush2.bf16.msra.mxu0 0
    %135 = vmatprep.subr.bf16.mxu0 0
    %136 = vmatpush2.bf16.msra.mxu0 0
    %137 = vmatprep.subr.bf16.mxu0 0
    %138 = vmatpush2.bf16.msra.mxu0 0
    %139 = vmatprep.subr.bf16.mxu0 0
    %140 = vmatpush2.bf16.msra.mxu0 0
    %141 = vmatprep.subr.bf16.mxu0 0
    %142 = vmatpush2.bf16.msra.mxu0 0
    %143 = vmatprep.subr.bf16.mxu0 0
    %144 = vmatpush2.bf16.msra.mxu0 0
    %145 = vmatprep.subr.bf16.mxu0 0
    %146 = vmatpush2.bf16.msra.mxu0 0
    %147 = vmatprep.subr.bf16.mxu0 0
    %148 = vmatpush2.bf16.msra.mxu0 0
    %149 = vmatprep.mubr.bf16.mxu0 0
    %150 = vmatmul.mubr.bf16.gmra.mxu0 %v115
    %v151 = vpop.f32.mrf.mxu0
    %v152 = vadd.f32 %v101, %v151
    %v153 = vpop.f32.mrf.mxu0
    %v154 = vpop.f32.mrf.mxu0
    %v155 = vadd.f32 %v101, %v154
    %v156 = vpop.f32.mrf.mxu0
    %157 = vdwg.mxu0
    %v158 = vmax.f32 %v152, 0.0
    %v159 = vmax.f32 %v155, 0.0
    %v160 = vpack.c.bf16 %v159, %v158
    %v161 = vld [vmem:[#allocation7] sm:$0xf]
    %v162 = vld [vmem:[#allocation7 + $0x4] sm:$0xf]
    %v163 = vld [vmem:[#allocation7 + $0x8] sm:$0xf]
    %v164 = vld [vmem:[#allocation7 + $0xc] sm:$0xf]
    %v165 = vld [vmem:[#allocation7 + $0x10] sm:$0xf]
    %v166 = vld [vmem:[#allocation7 + $0x14] sm:$0xf]
    %v167 = vld [vmem:[#allocation7 + $0x18] sm:$0xf]
    %v168 = vld [vmem:[#allocation7 + $0x1c] sm:$0xf]
    %v169 = vld [vmem:[#allocation7 + $0x20] sm:$0xf]
    %v170 = vld [vmem:[#allocation7 + $0x24] sm:$0xf]
    %v171 = vld [vmem:[#allocation7 + $0x28] sm:$0xf]
    %v172 = vld [vmem:[#allocation7 + $0x2c] sm:$0xf]
    %v173 = vld [vmem:[#allocation7 + $0x30] sm:$0xf]
    %v174 = vld [vmem:[#allocation7 + $0x34] sm:$0xf]
    %v175 = vld [vmem:[#allocation7 + $0x38] sm:$0xf]
    %v176 = vld [vmem:[#allocation7 + $0x3c] sm:$0xf]
    %v177 = vld [vmem:[%s5 + $0x1] sm:$0x1]
    %v178 = vlaneseq
    %v179 = vshrl.u32 %v178, 7
    %v180 = vsub.s32 0, %v179
    %v181 = vrot.slane %v177, %v180
    %v198 = vunpack.c.l.b16 %v161
    %v199 = vunpack.c.l.b16 %v162
    %v200 = vunpack.c.l.b16 %v163
    %v201 = vunpack.c.l.b16 %v164
    %v202 = vunpack.c.l.b16 %v165
    %v203 = vunpack.c.l.b16 %v166
    %v204 = vunpack.c.l.b16 %v167
    %v205 = vunpack.c.l.b16 %v168
    %v206 = vunpack.c.l.b16 %v169
    %v207 = vunpack.c.l.b16 %v170
    %v208 = vunpack.c.l.b16 %v171
    %v209 = vunpack.c.l.b16 %v172
    %v210 = vunpack.c.l.b16 %v173
    %v211 = vunpack.c.l.b16 %v174
    %v212 = vunpack.c.l.b16 %v175
    %v213 = vunpack.c.l.b16 %v176
    %v214 = vpack.c.b16 %v199, %v198
    %v215 = vpack.c.b16 %v201, %v200
    %v216 = vpack.c.b16 %v203, %v202
    %v217 = vpack.c.b16 %v205, %v204
    %v218 = vpack.c.b16 %v207, %v206
    %v219 = vpack.c.b16 %v209, %v208
    %v220 = vpack.c.b16 %v211, %v210
    %v221 = vpack.c.b16 %v213, %v212
    %230 = vmatprep.subr.bf16.mxu0 0
    %231 = vmatpush1.bf16.msra.mxu0 %v221
    %232 = vmatprep.subr.bf16.mxu0 0
    %233 = vmatpush1.bf16.msra.mxu0 %v220
    %234 = vmatprep.subr.bf16.mxu0 0
    %235 = vmatpush1.bf16.msra.mxu0 %v219
    %236 = vmatprep.subr.bf16.mxu0 0
    %237 = vmatpush1.bf16.msra.mxu0 %v218
    %238 = vmatprep.subr.bf16.mxu0 0
    %239 = vmatpush1.bf16.msra.mxu0 %v217
    %240 = vmatprep.subr.bf16.mxu0 0
    %241 = vmatpush1.bf16.msra.mxu0 %v216
    %242 = vmatprep.subr.bf16.mxu0 0
    %243 = vmatpush1.bf16.msra.mxu0 %v215
    %244 = vmatprep.subr.bf16.mxu0 0
    %245 = vmatpush1.bf16.msra.mxu0 %v214
    %246 = vmatprep.subr.bf16.mxu0 0
    %247 = vmatpush2.bf16.msra.mxu0 0
    %248 = vmatprep.subr.bf16.mxu0 0
    %249 = vmatpush2.bf16.msra.mxu0 0
    %250 = vmatprep.subr.bf16.mxu0 0
    %251 = vmatpush2.bf16.msra.mxu0 0
    %252 = vmatprep.subr.bf16.mxu0 0
    %253 = vmatpush2.bf16.msra.mxu0 0
    %254 = vmatprep.subr.bf16.mxu0 0
    %255 = vmatpush2.bf16.msra.mxu0 0
    %256 = vmatprep.subr.bf16.mxu0 0
    %257 = vmatpush2.bf16.msra.mxu0 0
    %258 = vmatprep.subr.bf16.mxu0 0
    %259 = vmatpush2.bf16.msra.mxu0 0
    %260 = vmatprep.subr.bf16.mxu0 0
    %261 = vmatpush2.bf16.msra.mxu0 0
    %262 = vmatprep.mubr.bf16.mxu0 0
    %263 = vmatmul.mubr.bf16.gmra.mxu0 %v160
    %v264 = vpop.f32.mrf.mxu0
    %v265 = vadd.f32 %v181, %v264
    %v266 = vpop.f32.mrf.mxu0
    %v267 = vpop.f32.mrf.mxu0
    %v268 = vadd.f32 %v181, %v267
    %v269 = vpop.f32.mrf.mxu0
    %270 = vdwg.mxu0
    %v271 = vmax.f32 %v265, 0.0
    %v272 = vmax.f32 %v268, 0.0
    %v273 = vpack.c.bf16 %v272, %v271
    %v274 = vld [vmem:[#allocation8] sm:$0xf]
    %v275 = vld [vmem:[#allocation8 + $0x4] sm:$0xf]
    %v276 = vld [vmem:[#allocation8 + $0x8] sm:$0xf]
    %v277 = vld [vmem:[#allocation8 + $0xc] sm:$0xf]
    %v278 = vld [vmem:[#allocation8 + $0x10] sm:$0xf]
    %v279 = vld [vmem:[#allocation8 + $0x14] sm:$0xf]
    %v280 = vld [vmem:[#allocation8 + $0x18] sm:$0xf]
    %v281 = vld [vmem:[#allocation8 + $0x1c] sm:$0xf]
    %v282 = vld [vmem:[#allocation8 + $0x20] sm:$0xf]
    %v283 = vld [vmem:[#allocation8 + $0x24] sm:$0xf]
    %v284 = vld [vmem:[#allocation8 + $0x28] sm:$0xf]
    %v285 = vld [vmem:[#allocation8 + $0x2c] sm:$0xf]
    %v286 = vld [vmem:[#allocation8 + $0x30] sm:$0xf]
    %v287 = vld [vmem:[#allocation8 + $0x34] sm:$0xf]
    %v288 = vld [vmem:[#allocation8 + $0x38] sm:$0xf]
    %v289 = vld [vmem:[#allocation8 + $0x3c] sm:$0xf]
    %v290 = vld [vmem:[%s5 + $0x2] sm:$0x1]
    %v291 = vlaneseq
    %v292 = vshrl.u32 %v291, 7
    %v293 = vsub.s32 0, %v292
    %v294 = vrot.slane %v290, %v293
    %v311 = vunpack.c.l.b16 %v274
    %v312 = vunpack.c.l.b16 %v275
    %v313 = vunpack.c.l.b16 %v276
    %v314 = vunpack.c.l.b16 %v277
    %v315 = vunpack.c.l.b16 %v278
    %v316 = vunpack.c.l.b16 %v279
    %v317 = vunpack.c.l.b16 %v280
    %v318 = vunpack.c.l.b16 %v281
    %v319 = vunpack.c.l.b16 %v282
    %v320 = vunpack.c.l.b16 %v283
    %v321 = vunpack.c.l.b16 %v284
    %v322 = vunpack.c.l.b16 %v285
    %v323 = vunpack.c.l.b16 %v286
    %v324 = vunpack.c.l.b16 %v287
    %v325 = vunpack.c.l.b16 %v288
    %v326 = vunpack.c.l.b16 %v289
    %v327 = vpack.c.b16 %v312, %v311
    %v328 = vpack.c.b16 %v314, %v313
    %v329 = vpack.c.b16 %v316, %v315
    %v330 = vpack.c.b16 %v318, %v317
    %v331 = vpack.c.b16 %v320, %v319
    %v332 = vpack.c.b16 %v322, %v321
    %v333 = vpack.c.b16 %v324, %v323
    %v334 = vpack.c.b16 %v326, %v325
    %343 = vmatprep.subr.bf16.mxu0 0
    %344 = vmatpush1.bf16.msra.mxu0 %v334
    %345 = vmatprep.subr.bf16.mxu0 0
    %346 = vmatpush1.bf16.msra.mxu0 %v333
    %347 = vmatprep.subr.bf16.mxu0 0
    %348 = vmatpush1.bf16.msra.mxu0 %v332
    %349 = vmatprep.subr.bf16.mxu0 0
    %350 = vmatpush1.bf16.msra.mxu0 %v331
    %351 = vmatprep.subr.bf16.mxu0 0
    %352 = vmatpush1.bf16.msra.mxu0 %v330
    %353 = vmatprep.subr.bf16.mxu0 0
    %354 = vmatpush1.bf16.msra.mxu0 %v329
    %355 = vmatprep.subr.bf16.mxu0 0
    %356 = vmatpush1.bf16.msra.mxu0 %v328
    %357 = vmatprep.subr.bf16.mxu0 0
    %358 = vmatpush1.bf16.msra.mxu0 %v327
    %359 = vmatprep.subr.bf16.mxu0 0
    %360 = vmatpush2.bf16.msra.mxu0 0
    %361 = vmatprep.subr.bf16.mxu0 0
    %362 = vmatpush2.bf16.msra.mxu0 0
    %363 = vmatprep.subr.bf16.mxu0 0
    %364 = vmatpush2.bf16.msra.mxu0 0
    %365 = vmatprep.subr.bf16.mxu0 0
    %366 = vmatpush2.bf16.msra.mxu0 0
    %367 = vmatprep.subr.bf16.mxu0 0
    %368 = vmatpush2.bf16.msra.mxu0 0
    %369 = vmatprep.subr.bf16.mxu0 0
    %370 = vmatpush2.bf16.msra.mxu0 0
    %371 = vmatprep.subr.bf16.mxu0 0
    %372 = vmatpush2.bf16.msra.mxu0 0
    %373 = vmatprep.subr.bf16.mxu0 0
    %374 = vmatpush2.bf16.msra.mxu0 0
    %375 = vmatprep.mubr.bf16.mxu0 0
    %376 = vmatmul.mubr.bf16.gmra.mxu0 %v273
    %v377 = vpop.f32.mrf.mxu0
    %v378 = vadd.f32 %v294, %v377
    %v379 = vpop.f32.mrf.mxu0
    %v380 = vpop.f32.mrf.mxu0
    %v381 = vadd.f32 %v294, %v380
    %v382 = vpop.f32.mrf.mxu0
    %383 = vdwg.mxu0
    %v384 = vmax.f32 %v378, 0.0
    %v385 = vmax.f32 %v381, 0.0
    %v386 = vpack.c.bf16 %v385, %v384
    %v387 = vld [vmem:[#allocation10] sm:$0xf]
    %v388 = vld [vmem:[#allocation10 + $0x4] sm:$0xf]
    %v389 = vld [vmem:[#allocation10 + $0x8] sm:$0xf]
    %v390 = vld [vmem:[#allocation10 + $0xc] sm:$0xf]
    %v391 = vld [vmem:[#allocation10 + $0x10] sm:$0xf]
    %v392 = vld [vmem:[#allocation10 + $0x14] sm:$0xf]
    %v393 = vld [vmem:[#allocation10 + $0x18] sm:$0xf]
    %v394 = vld [vmem:[#allocation10 + $0x1c] sm:$0xf]
    %v395 = vld [vmem:[#allocation10 + $0x20] sm:$0xf]
    %v396 = vld [vmem:[#allocation10 + $0x24] sm:$0xf]
    %v397 = vld [vmem:[#allocation10 + $0x28] sm:$0xf]
    %v398 = vld [vmem:[#allocation10 + $0x2c] sm:$0xf]
    %v399 = vld [vmem:[#allocation10 + $0x30] sm:$0xf]
    %v400 = vld [vmem:[#allocation10 + $0x34] sm:$0xf]
    %v401 = vld [vmem:[#allocation10 + $0x38] sm:$0xf]
    %v402 = vld [vmem:[#allocation10 + $0x3c] sm:$0xf]
    %v403 = vld [vmem:[%s5 + $0x3] sm:$0x1]
    %v404 = vlaneseq
    %v405 = vshrl.u32 %v404, 7
    %v406 = vsub.s32 0, %v405
    %v407 = vrot.slane %v403, %v406
    %v424 = vunpack.c.l.b16 %v387
    %v425 = vunpack.c.l.b16 %v388
    %v426 = vunpack.c.l.b16 %v389
    %v427 = vunpack.c.l.b16 %v390
    %v428 = vunpack.c.l.b16 %v391
    %v429 = vunpack.c.l.b16 %v392
    %v430 = vunpack.c.l.b16 %v393
    %v431 = vunpack.c.l.b16 %v394
    %v432 = vunpack.c.l.b16 %v395
    %v433 = vunpack.c.l.b16 %v396
    %v434 = vunpack.c.l.b16 %v397
    %v435 = vunpack.c.l.b16 %v398
    %v436 = vunpack.c.l.b16 %v399
    %v437 = vunpack.c.l.b16 %v400
    %v438 = vunpack.c.l.b16 %v401
    %v439 = vunpack.c.l.b16 %v402
    %v440 = vpack.c.b16 %v425, %v424
    %v441 = vpack.c.b16 %v427, %v426
    %v442 = vpack.c.b16 %v429, %v428
    %v443 = vpack.c.b16 %v431, %v430
    %v444 = vpack.c.b16 %v433, %v432
    %v445 = vpack.c.b16 %v435, %v434
    %v446 = vpack.c.b16 %v437, %v436
    %v447 = vpack.c.b16 %v439, %v438
    %456 = vmatprep.subr.bf16.mxu0 0
    %457 = vmatpush1.bf16.msra.mxu0 %v447
    %458 = vmatprep.subr.bf16.mxu0 0
    %459 = vmatpush1.bf16.msra.mxu0 %v446
    %460 = vmatprep.subr.bf16.mxu0 0
    %461 = vmatpush1.bf16.msra.mxu0 %v445
    %462 = vmatprep.subr.bf16.mxu0 0
    %463 = vmatpush1.bf16.msra.mxu0 %v444
    %464 = vmatprep.subr.bf16.mxu0 0
    %465 = vmatpush1.bf16.msra.mxu0 %v443
    %466 = vmatprep.subr.bf16.mxu0 0
    %467 = vmatpush1.bf16.msra.mxu0 %v442
    %468 = vmatprep.subr.bf16.mxu0 0
    %469 = vmatpush1.bf16.msra.mxu0 %v441
    %470 = vmatprep.subr.bf16.mxu0 0
    %471 = vmatpush1.bf16.msra.mxu0 %v440
    %472 = vmatprep.subr.bf16.mxu0 0
    %473 = vmatpush2.bf16.msra.mxu0 0
    %474 = vmatprep.subr.bf16.mxu0 0
    %475 = vmatpush2.bf16.msra.mxu0 0
    %476 = vmatprep.subr.bf16.mxu0 0
    %477 = vmatpush2.bf16.msra.mxu0 0
    %478 = vmatprep.subr.bf16.mxu0 0
    %479 = vmatpush2.bf16.msra.mxu0 0
    %480 = vmatprep.subr.bf16.mxu0 0
    %481 = vmatpush2.bf16.msra.mxu0 0
    %482 = vmatprep.subr.bf16.mxu0 0
    %483 = vmatpush2.bf16.msra.mxu0 0
    %484 = vmatprep.subr.bf16.mxu0 0
    %485 = vmatpush2.bf16.msra.mxu0 0
    %486 = vmatprep.subr.bf16.mxu0 0
    %487 = vmatpush2.bf16.msra.mxu0 0
    %488 = vmatprep.mubr.bf16.mxu0 0
    %489 = vmatmul.mubr.bf16.gmra.mxu0 %v386
    %v490 = vpop.f32.mrf.mxu0
    %v491 = vadd.f32 %v407, %v490
    %v492 = vpop.f32.mrf.mxu0
    %v493 = vpop.f32.mrf.mxu0
    %v494 = vadd.f32 %v407, %v493
    %v495 = vpop.f32.mrf.mxu0
    %496 = vdwg.mxu0
    %v497 = vpack.c.bf16 %v494, %v491
    %v499 = vunpack.c.l.b16 %v497
    %v500 = vunpack.c.h.b16 %v497
    %v501 = vpack.c.b16 %v499, %v499
    %v502 = vpack.c.b16 %v500, %v500
    %505 = vst [vmem:[#allocation11] sm:$0xf] %v501
    %506 = vst [vmem:[#allocation11 + $0x4] sm:$0xf] %v502
    // Predicated region
    $region46: #{tpu_custom_call.1} parent=1 // pred_check
      _
    $region47: #{tpu_custom_call.1} parent=1 // pred_check_branch
      %508 = sbr.rel (0) target = $region49
    $region48: #{tpu_custom_call.1} parent=1 // pred_region
      %s510 = ssub.s32 128, 128
      %511 = vsyncadd [#allocation4], %s510
      %s512 = sshll.u32 [#allocation11], 4
      %s513 = int_to_ptr.vmem [resolvable:$true] %s512
      %518 = dma.vmem_to_hbm [thread:$0]  %s513, 128, %s6, [#allocation4], 64, 64, 4
    $region49: #{tpu_custom_call.1} parent=1 // pred_fallthru
      _
    // Predicated region
    $region50: #{tpu_custom_call.1} parent=1 // pred_check
      _
    $region51: #{tpu_custom_call.1} parent=1 // pred_check_branch
      %520 = sbr.rel (0) target = $region53
    $region52: #{tpu_custom_call.1} parent=1 // pred_region
      %521 = dma.done [#allocation4], 128
    $region53: #{tpu_custom_call.1} parent=1 // pred_fallthru
      _
    %522 = vsyncpa [#allocation3], 1
    %523 = vsyncpa [#allocation6], 1
    %524 = vsyncpa [#allocation9], 1
    %525 = vsyncpa [#allocation4], 1

</llo_original>
